<compile_context>
chip_gen: v7x
topology: tpu7x:2x2x1
jax: 0.10.0
libtpu: 0.0.40
codegen_flags: <defaults>
</compile_context>

<pallas_src>
import jax
import jax.numpy as jnp
from jax.experimental import pallas as pl
from jax.experimental.pallas import tpu as pltpu


def _round_up(x, m):
    return ((x + m - 1) // m) * m


def gcn_kernel(a_ref, h_ref, dr_k_ref, dr_i_ref, w_ref, o_ref, acc_ref):
    """One (row-tile i, K-tile k) step of relu(diag(dr) A_hat diag(dr) H W).

    a_ref    : (TM, TK)   tile of A_hat
    h_ref    : (TK, F)    rows of H matching this K tile
    dr_k_ref : (TK, 1)    d^{-1/2} entries for this K tile (columns of A)
    dr_i_ref : (TM, 1)    d^{-1/2} entries for this row tile (rows of A)
    w_ref    : (F, Dpad)  full weight matrix (resident, lane-padded)
    o_ref    : (TM, Dpad) output tile (resident across k, lane-dense)
    acc_ref  : (TM, F)    f32 accumulator for the A_tilde @ H row tile
    """
    k = pl.program_id(1)

    @pl.when(k == 0)
    def _():
        acc_ref[...] = jnp.zeros_like(acc_ref)

    # Column scaling of A_tilde == row scaling of H: A_hat @ (dr ⊙ H).
    # Scaling the (TK, F) H block is far cheaper than scaling the (TM, TK)
    # A tile (F << TK).
    h_scaled = h_ref[...] * dr_k_ref[...]
    acc_ref[...] += jnp.dot(a_ref[...], h_scaled,
                            preferred_element_type=jnp.float32)

    @pl.when(k == pl.num_programs(1) - 1)
    def _():
        # Row scaling of A_tilde applied once to the accumulated AH tile, then
        # the (tiny-K) contraction with W, f32 ReLU epilogue, lane-dense store.
        ah = acc_ref[...] * dr_i_ref[...]
        out = jnp.dot(ah, w_ref[...], preferred_element_type=jnp.float32)
        o_ref[...] = jnp.maximum(out, 0.0).astype(o_ref.dtype)


def gcn_forward(a_hat, d_inv_root, h, w, *, tile=256):
    """relu(diag(d_inv_root) @ a_hat @ diag(d_inv_root) @ h @ w)."""
    n = a_hat.shape[0]
    f = h.shape[1]
    d = w.shape[1]

    # --- Padded problem sizes -------------------------------------------
    if n <= tile:
        n_pad = _round_up(n, 8)          # single block along rows and K
        tm = tk = n_pad
    else:
        tm = tk = tile                   # 256-aligned tiles (MXU-friendly)
        n_pad = _round_up(n, tile)
    f_pad = _round_up(f, 8)              # sublane-align features only; keeps
                                         # H traffic at ~n*f, not n*128
    d_pad = _round_up(d, 128)            # lane-dense output / W columns

    # --- Zero-pad operands (padded rows/cols contribute exact zeros) ----
    a_p = jnp.zeros((n_pad, n_pad), jnp.float32).at[:n, :n].set(a_hat)
    h_p = jnp.zeros((n_pad, f_pad), jnp.float32).at[:n, :f].set(h)
    w_p = jnp.zeros((f_pad, d_pad), jnp.float32).at[:f, :d].set(w)
    dr_p = jnp.zeros((n_pad, 1), jnp.float32).at[:n, 0].set(d_inv_root)

    grid = (n_pad // tm, n_pad // tk)

    out = pl.pallas_call(
        gcn_kernel,
        out_shape=jax.ShapeDtypeStruct((n_pad, d_pad), jnp.float32),
        grid_spec=pltpu.PrefetchScalarGridSpec(
            num_scalar_prefetch=0,
            grid=grid,
            in_specs=[
                pl.BlockSpec((tm, tk), lambda i, k: (i, k)),        # A_hat tile
                pl.BlockSpec((tk, f_pad), lambda i, k: (k, 0)),     # H rows
                pl.BlockSpec((tk, 1), lambda i, k: (k, 0)),         # dr (cols)
                pl.BlockSpec((tm, 1), lambda i, k: (i, 0)),         # dr (rows)
                pl.BlockSpec((f_pad, d_pad), lambda i, k: (0, 0)),  # W resident
            ],
            out_specs=pl.BlockSpec((tm, d_pad), lambda i, k: (i, 0)),
            scratch_shapes=[pltpu.VMEM((tm, f_pad), jnp.float32)],
        ),
        compiler_params=pltpu.CompilerParams(
            # Row axis parallel (megacore / v7x 2 TCs), reduction axis arbitrary.
            dimension_semantics=("parallel", "arbitrary"),
            # ~1 MiB actually used at tile=256; explicit limit leaves headroom
            # and is safe on v7x's smaller (64 MiB physical) VMEM.
            vmem_limit_bytes=32 * 1024 * 1024,
        ),
    )(a_p, h_p, dr_p, dr_p, w_p)

    return out[:n, :d]


def gcn_reference(a, h, w):
    """Pure-JAX reference matching the PyTorch module semantics."""
    n = a.shape[0]
    a_hat = jnp.eye(n, dtype=jnp.float32) + a
    dr = 1.0 / jnp.sqrt(a_hat.sum(axis=1))
    a_tilde = a_hat * dr[:, None] * dr[None, :]
    return jnp.maximum(a_tilde @ h @ w, 0.0)


if __name__ == "__main__":
    def make_case(key, num_nodes, num_features, hidden_dim):
        k_a, k_h, k_w = jax.random.split(key, 3)
        # Deterministic symmetric 0/1 adjacency, no self loops (I added in A_hat).
        upper = (jax.random.uniform(k_a, (num_nodes, num_nodes)) > 0.7)
        upper = jnp.triu(upper.astype(jnp.float32), k=1)
        A = upper + upper.T
        H = jax.random.normal(k_h, (num_nodes, num_features), dtype=jnp.float32)
        # W ~ Normal(1, 1/hidden_dim) per the module's init (deterministic here).
        W = 1.0 + jax.random.normal(
            k_w, (num_features, hidden_dim), dtype=jnp.float32) / hidden_dim
        return A, H, W

    key = jax.random.PRNGKey(0)
    k1, k2 = jax.random.split(key)

    ok = True
    # Case 1: module-scale toy shapes (single-block grid).
    # Case 2: exercises the multi-tile row axis and the K-reduction accumulator.
    for (k, n, f, d) in [(k1, 16, 8, 32), (k2, 300, 8, 32)]:
        A, H, W = make_case(k, n, f, d)

        # Glue matching __init__: A_hat = I + A, D diagonal, so D^{-1/2} is
        # elementwise 1/sqrt(deg); the scaling itself is fused into the kernel.
        a_hat = jnp.eye(n, dtype=jnp.float32) + A
        d_inv_root = 1.0 / jnp.sqrt(a_hat.sum(axis=1))

        out = gcn_forward(a_hat, d_inv_root, H, W)
        out = jax.block_until_ready(out)

        ref = gcn_reference(A, H, W)
        assert out.shape == (n, d)
        ok = ok and bool(jnp.allclose(out, ref, atol=1e-4, rtol=1e-4))

    if ok:
        print("KERNEL_OK")
</pallas_src>

<mosaic_0001>
module attributes {stable_mosaic.version = 11 : i64} {
  func.func @gcn_kernel(%arg0: i32, %arg1: i32, %arg2: memref<16x16xf32, #tpu.memory_space<vmem>>, %arg3: memref<16x8xf32, #tpu.memory_space<vmem>>, %arg4: memref<16x1xf32, #tpu.memory_space<vmem>>, %arg5: memref<16x1xf32, #tpu.memory_space<vmem>>, %arg6: memref<8x128xf32, #tpu.memory_space<vmem>>, %arg7: memref<16x128xf32, #tpu.memory_space<vmem>>, %arg8: memref<16x8xf32, #tpu.memory_space<vmem>>) attributes {dimension_semantics = [#tpu.dimension_semantics<parallel>, #tpu.dimension_semantics<arbitrary>], iteration_bounds = array<i64: 1, 1>, scalar_prefetch = 0 : i64, scratch_operands = 1 : i64, tpu.core_type = #tpu.core_type<tc>, window_params = [{transform_indices = @transform_0, window_bounds = array<i64: 16, 16>}, {transform_indices = @transform_1, window_bounds = array<i64: 16, 8>}, {transform_indices = @transform_2, window_bounds = array<i64: 16, 1>}, {transform_indices = @transform_3, window_bounds = array<i64: 16, 1>}, {pipeline_mode = #tpu.pipeline_mode<synchronous>, transform_indices = @transform_4, window_bounds = array<i64: 8, 128>}, {transform_indices = @transform_5, window_bounds = array<i64: 16, 128>}]} {
    %c0_i32 = arith.constant 0 : i32
    %0 = arith.cmpi eq, %arg1, %c0_i32 : i32
    %1 = arith.extui %0 : i1 to i32
    %c0_i32_0 = arith.constant 0 : i32
    %2 = arith.cmpi ne, %1, %c0_i32_0 : i32
    scf.if %2 {
      %cst_12 = arith.constant 0.000000e+00 : f32
      %15 = vector.broadcast %cst_12 : f32 to vector<16x8xf32>
      %c0_13 = arith.constant 0 : index
      %c0_14 = arith.constant 0 : index
      %16 = vector.load %arg8[%c0_13, %c0_14] : memref<16x8xf32, #tpu.memory_space<vmem>>, vector<16x8xf32>
      tpu.vector_store %arg8[%c0_13, %c0_14], %15 {strides = array<i32>} : memref<16x8xf32, #tpu.memory_space<vmem>>, vector<16x8xf32>,
    } else {
    }
    %c0 = arith.constant 0 : index
    %c0_1 = arith.constant 0 : index
    %3 = vector.load %arg3[%c0, %c0_1] : memref<16x8xf32, #tpu.memory_space<vmem>>, vector<16x8xf32>
    %c0_2 = arith.constant 0 : index
    %c0_3 = arith.constant 0 : index
    %4 = vector.load %arg4[%c0_2, %c0_3] : memref<16x1xf32, #tpu.memory_space<vmem>>, vector<16x1xf32>
    %5 = vector.broadcast %4 : vector<16x1xf32> to vector<16x8xf32>
    %6 = arith.mulf %3, %5 : vector<16x8xf32>
    %c0_4 = arith.constant 0 : index
    %c0_5 = arith.constant 0 : index
    %7 = vector.load %arg8[%c0_4, %c0_5] : memref<16x8xf32, #tpu.memory_space<vmem>>, vector<16x8xf32>
    %c0_6 = arith.constant 0 : index
    %c0_7 = arith.constant 0 : index
    %8 = vector.load %arg2[%c0_6, %c0_7] : memref<16x16xf32, #tpu.memory_space<vmem>>, vector<16x16xf32>
    %cst = arith.constant dense<0.000000e+00> : vector<16x8xf32>
    %9 = tpu.matmul %8, %6, %cst {dimension_numbers = #tpu.dot_dimension_numbers<[1], [0], [0], [1], [0, 0, 1, 1], [], []>} : vector<16x16xf32>, vector<16x8xf32>, vector<16x8xf32> -> vector<16x8xf32>
    %10 = arith.addf %7, %9 : vector<16x8xf32>
    %c0_8 = arith.constant 0 : index
    %c0_9 = arith.constant 0 : index
    %11 = vector.load %arg8[%c0_8, %c0_9] : memref<16x8xf32, #tpu.memory_space<vmem>>, vector<16x8xf32>
    tpu.vector_store %arg8[%c0_8, %c0_9], %10 {strides = array<i32>} : memref<16x8xf32, #tpu.memory_space<vmem>>, vector<16x8xf32>,
    %c0_i32_10 = arith.constant 0 : i32
    %12 = arith.cmpi eq, %arg1, %c0_i32_10 : i32
    %13 = arith.extui %12 : i1 to i32
    %c0_i32_11 = arith.constant 0 : i32
    %14 = arith.cmpi ne, %13, %c0_i32_11 : i32
    scf.if %14 {
      %c0_12 = arith.constant 0 : index
      %c0_13 = arith.constant 0 : index
      %15 = vector.load %arg8[%c0_12, %c0_13] : memref<16x8xf32, #tpu.memory_space<vmem>>, vector<16x8xf32>
      %c0_14 = arith.constant 0 : index
      %c0_15 = arith.constant 0 : index
      %16 = vector.load %arg5[%c0_14, %c0_15] : memref<16x1xf32, #tpu.memory_space<vmem>>, vector<16x1xf32>
      %17 = vector.broadcast %16 : vector<16x1xf32> to vector<16x8xf32>
      %18 = arith.mulf %15, %17 : vector<16x8xf32>
      %c0_16 = arith.constant 0 : index
      %c0_17 = arith.constant 0 : index
      %19 = vector.load %arg6[%c0_16, %c0_17] : memref<8x128xf32, #tpu.memory_space<vmem>>, vector<8x128xf32>
      %cst_18 = arith.constant dense<0.000000e+00> : vector<16x128xf32>
      %20 = tpu.matmul %18, %19, %cst_18 {dimension_numbers = #tpu.dot_dimension_numbers<[1], [0], [0], [1], [0, 0, 1, 1], [], []>} : vector<16x8xf32>, vector<8x128xf32>, vector<16x128xf32> -> vector<16x128xf32>
      %cst_19 = arith.constant 0.000000e+00 : f32
      %21 = vector.broadcast %cst_19 : f32 to vector<16x128xf32>
      %22 = arith.maximumf %20, %21 : vector<16x128xf32>
      %c0_20 = arith.constant 0 : index
      %c0_21 = arith.constant 0 : index
      %23 = vector.load %arg7[%c0_20, %c0_21] : memref<16x128xf32, #tpu.memory_space<vmem>>, vector<16x128xf32>
      tpu.vector_store %arg7[%c0_20, %c0_21], %22 {strides = array<i32>} : memref<16x128xf32, #tpu.memory_space<vmem>>, vector<16x128xf32>,
    } else {
    }
    return
  }
  func.func @transform_0(%arg0: i32, %arg1: i32) -> (i32, i32) {
    %c0_i32 = arith.constant 0 : i32
    return %arg0, %arg1 : i32, i32
  }
  func.func @transform_1(%arg0: i32, %arg1: i32) -> (i32, i32) {
    %c0_i32 = arith.constant 0 : i32
    %c0_i32_0 = arith.constant 0 : i32
    return %arg1, %c0_i32 : i32, i32
  }
  func.func @transform_2(%arg0: i32, %arg1: i32) -> (i32, i32) {
    %c0_i32 = arith.constant 0 : i32
    %c0_i32_0 = arith.constant 0 : i32
    return %arg1, %c0_i32 : i32, i32
  }
  func.func @transform_3(%arg0: i32, %arg1: i32) -> (i32, i32) {
    %c0_i32 = arith.constant 0 : i32
    %c0_i32_0 = arith.constant 0 : i32
    return %arg0, %c0_i32 : i32, i32
  }
  func.func @transform_4(%arg0: i32, %arg1: i32) -> (i32, i32) {
    %c0_i32 = arith.constant 0 : i32
    %c0_i32_0 = arith.constant 0 : i32
    %c0_i32_1 = arith.constant 0 : i32
    return %c0_i32, %c0_i32_0 : i32, i32
  }
  func.func @transform_5(%arg0: i32, %arg1: i32) -> (i32, i32) {
    %c0_i32 = arith.constant 0 : i32
    %c0_i32_0 = arith.constant 0 : i32
    return %arg0, %c0_i32 : i32, i32
  }
}

</mosaic_0001>

<llo_original>
// kernel: tpu_custom_call.1
$region0: #{tpu_custom_call.1}
  #allocation0 [shape = 'u32[]', space=smem, size = 0x4, offset = 0x4, fixed_abs, tag = 'smem constant byte address 0x4 - core index']
  #allocation1 [shape = 'u32[144,128]{1,0:T(1,128)}', space=vmem, size = 0x12000, scoped, tag = 'internal scratch']
  #allocation2 [shape = 'f32[16,8]{1,0:T(8,128)}', space=vmem, size = 0x2000, scoped, tag = 'scratch operand']
  %s0 = inlined_call_operand.vmem [shape: f32[16,16], index: 0, kind: input, shape index: {}]
  %s1 = inlined_call_operand.vmem [shape: f32[16,8], index: 1, kind: input, shape index: {}]
  %s2 = inlined_call_operand.vmem [shape: f32[16,1], index: 2, kind: input, shape index: {}]
  %s3 = inlined_call_operand.vmem [shape: f32[16,1], index: 3, kind: input, shape index: {}]
  %s4 = inlined_call_operand.vmem [shape: f32[8,128], index: 4, kind: input, shape index: {}]
  %s5 = inlined_call_operand.hbm [shape: f32[16,128], index: 5, kind: output, shape index: {}]
  %s6 = sld [smem:[#allocation0]]
  $region38: #{tpu_custom_call.1} parent=0
    _
  %s8 = ssub.s32 1, %s6
  %s9 = scalar_select 0, %s8, %s6
  $region1: #{tpu_custom_call.1} parent=0
    #allocation3 [shape = 'u8[8192]{0}', space=vmem, size = 0x2000, scoped, tag = 'output window, operand 0, single buffered']
    #allocation4 [shape = 's32[1]{0}', space=sflag, size = 0x4, scoped, tag = 'scoped memory for tpu_custom_call.1']
    %10 = vsyncpa [#allocation4], 0
    // Predicated region
    $region2: #{tpu_custom_call.1} parent=1 // pred_check
      _
    $region3: #{tpu_custom_call.1} parent=1 // pred_check_branch
      %12 = sbr.rel (0) target = $region5
    $region4: #{tpu_custom_call.1} parent=1 // pred_region
      _
    $region5: #{tpu_custom_call.1} parent=1 // pred_fallthru
      _
    // Predicated region
    $region6: #{tpu_custom_call.1} parent=1 // pred_check
      _
    $region7: #{tpu_custom_call.1} parent=1 // pred_check_branch
      %14 = sbr.rel (0) target = $region9
    $region8: #{tpu_custom_call.1} parent=1 // pred_region
      _
    $region9: #{tpu_custom_call.1} parent=1 // pred_fallthru
      _
    // Predicated region
    $region10: #{tpu_custom_call.1} parent=1 // pred_check
      _
    $region11: #{tpu_custom_call.1} parent=1 // pred_check_branch
      %16 = sbr.rel (0) target = $region13
    $region12: #{tpu_custom_call.1} parent=1 // pred_region
      _
    $region13: #{tpu_custom_call.1} parent=1 // pred_fallthru
      _
    // Predicated region
    $region14: #{tpu_custom_call.1} parent=1 // pred_check
      _
    $region15: #{tpu_custom_call.1} parent=1 // pred_check_branch
      %18 = sbr.rel (0) target = $region17
    $region16: #{tpu_custom_call.1} parent=1 // pred_region
      _
    $region17: #{tpu_custom_call.1} parent=1 // pred_fallthru
      _
    // Predicated region
    $region18: #{tpu_custom_call.1} parent=1 // pred_check
      _
    $region19: #{tpu_custom_call.1} parent=1 // pred_check_branch
      %20 = sbr.rel (0) target = $region21
    $region20: #{tpu_custom_call.1} parent=1 // pred_region
      _
    $region21: #{tpu_custom_call.1} parent=1 // pred_fallthru
      _
    %p21 = scmp.eq.s32.totalorder 0, 0
    // Predicated region
    $region22: #{tpu_custom_call.1} parent=1 // pred_check
      %p22 = pneg %p21
    $region23: #{tpu_custom_call.1} parent=1 // pred_check_branch
      %24 = sbr.rel (%p22) target = $region25
    $region24: #{tpu_custom_call.1} parent=1 // pred_region
      %vm25 = vcmask 64512
      %26 = vst.msk [vmem:[#allocation2] sm:$0xff] %vm25, 0.0
      %27 = vst.msk [vmem:[#allocation2 + $0x8] sm:$0xff] %vm25, 0.0
    $region25: #{tpu_custom_call.1} parent=1 // pred_fallthru
      _
    %v28 = vld [vmem:[%s1] sm:$0xff]
    %v29 = vld [vmem:[%s1 + $0x8] sm:$0xff]
    %v30 = vld [vmem:[%s2] sm:$0xff]
    %v31 = vld [vmem:[%s2 + $0x8] sm:$0xff]
    %33 = vset.pattern.permute.xlu0 0
    %34 = vperm.xlu0 %33, %v30
    %v35 = vpop.permute.xlu0 %34
    %38 = vset.pattern.permute.xlu0 0
    %39 = vperm.xlu0 %38, %v31
    %v40 = vpop.permute.xlu0 %39
    %v42 = vmul.f32 %v28, %v35
    %v43 = vmul.f32 %v29, %v40
    %v44 = vld [vmem:[#allocation2] sm:$0xff]
    %v45 = vld [vmem:[#allocation2 + $0x8] sm:$0xff]
    %v46 = vld [vmem:[%s0] sm:$0xff]
    %v47 = vld [vmem:[%s0 + $0x8] sm:$0xff]
    %vm48 = vcmask 130048
    %v50 = vsel %vm48, %v46, 0
    %v53 = vsel %vm48, %v47, 0
    %55 = vmatprep.subr.mxu0 0.0
    %56 = vmatpush1.msra.mxu0 %v42
    %57 = vmatprep.subr.mxu0 0.0
    %58 = vmatpush1.msra.mxu0 %v43
    %59 = vmatprep.subr.mxu0 0.0
    %60 = vmatpush1.msra.mxu0 0.0
    %61 = vmatprep.subr.mxu0 0.0
    %62 = vmatpush1.msra.mxu0 0.0
    %63 = vmatprep.subr.mxu0 0.0
    %64 = vmatpush1.msra.mxu0 0.0
    %65 = vmatprep.subr.mxu0 0.0
    %66 = vmatpush1.msra.mxu0 0.0
    %67 = vmatprep.subr.mxu0 0.0
    %68 = vmatpush1.msra.mxu0 0.0
    %69 = vmatprep.subr.mxu0 0.0
    %70 = vmatpush1.msra.mxu0 0.0
    %71 = vmatprep.subr.mxu0 0.0
    %72 = vmatpush1.msra.mxu0 0.0
    %73 = vmatprep.subr.mxu0 0.0
    %74 = vmatpush1.msra.mxu0 0.0
    %75 = vmatprep.subr.mxu0 0.0
    %76 = vmatpush1.msra.mxu0 0.0
    %77 = vmatprep.subr.mxu0 0.0
    %78 = vmatpush1.msra.mxu0 0.0
    %79 = vmatprep.subr.mxu0 0.0
    %80 = vmatpush1.msra.mxu0 0.0
    %81 = vmatprep.subr.mxu0 0.0
    %82 = vmatpush1.msra.mxu0 0.0
    %83 = vmatprep.subr.mxu0 0.0
    %84 = vmatpush1.msra.mxu0 0.0
    %85 = vmatprep.subr.mxu0 0.0
    %86 = vmatpush1.msra.mxu0 0.0
    %87 = vmatprep.subr.mxu0 0.0
    %88 = vmatpush1.msra.mxu0 0.0
    %89 = vmatprep.subr.mxu0 0.0
    %90 = vmatpush1.msra.mxu0 0.0
    %91 = vmatprep.subr.mxu0 0.0
    %92 = vmatpush1.msra.mxu0 0.0
    %93 = vmatprep.subr.mxu0 0.0
    %94 = vmatpush1.msra.mxu0 0.0
    %95 = vmatprep.subr.mxu0 0.0
    %96 = vmatpush1.msra.mxu0 0.0
    %97 = vmatprep.subr.mxu0 0.0
    %98 = vmatpush1.msra.mxu0 0.0
    %99 = vmatprep.subr.mxu0 0.0
    %100 = vmatpush1.msra.mxu0 0.0
    %101 = vmatprep.subr.mxu0 0.0
    %102 = vmatpush1.msra.mxu0 0.0
    %103 = vmatprep.subr.mxu0 0.0
    %104 = vmatpush1.msra.mxu0 0.0
    %105 = vmatprep.subr.mxu0 0.0
    %106 = vmatpush1.msra.mxu0 0.0
    %107 = vmatprep.subr.mxu0 0.0
    %108 = vmatpush1.msra.mxu0 0.0
    %109 = vmatprep.subr.mxu0 0.0
    %110 = vmatpush1.msra.mxu0 0.0
    %111 = vmatprep.subr.mxu0 0.0
    %112 = vmatpush1.msra.mxu0 0.0
    %113 = vmatprep.subr.mxu0 0.0
    %114 = vmatpush1.msra.mxu0 0.0
    %115 = vmatprep.subr.mxu0 0.0
    %116 = vmatpush1.msra.mxu0 0.0
    %117 = vmatprep.subr.mxu0 0.0
    %118 = vmatpush1.msra.mxu0 0.0
    %119 = vmatprep.mubr.f32.mxu0 0.0
    %120 = vmatmul.mubr.f32.gmra.mrb[0].mxu0 %v50
    %v121 = vpop.f32.mrb[0].mxu0
    %v122 = vadd.f32 0.0, %v121
    %v123 = vpop.f32.mrb[0].mxu0
    %124 = vmatprep.mubr.f32.mxu0 0.0
    %125 = vmatmul.mubr.f32.gmra.mrb[0].mxu0 %v53
    %v126 = vpop.f32.mrb[0].mxu0
    %v127 = vadd.f32 0.0, %v126
    %v128 = vpop.f32.mrb[0].mxu0
    %129 = vdwg.mxu0
    %v130 = vadd.f32 %v44, %v122
    %v131 = vadd.f32 %v45, %v127
    %vm132 = vcmask 64512
    %133 = vst.msk [vmem:[#allocation2] sm:$0xff] %vm132, %v130
    %134 = vst.msk [vmem:[#allocation2 + $0x8] sm:$0xff] %vm132, %v131
    // Predicated region
    $region26: #{tpu_custom_call.1} parent=1 // pred_check
      %p135 = pneg %p21
    $region27: #{tpu_custom_call.1} parent=1 // pred_check_branch
      %137 = sbr.rel (%p135) target = $region29
    $region28: #{tpu_custom_call.1} parent=1 // pred_region
      %v138 = vld [vmem:[#allocation2] sm:$0xff]
      %v139 = vld [vmem:[#allocation2 + $0x8] sm:$0xff]
      %v140 = vld [vmem:[%s3] sm:$0xff]
      %v141 = vld [vmem:[%s3 + $0x8] sm:$0xff]
      %143 = vset.pattern.permute.xlu0 0
      %144 = vperm.xlu0 %143, %v140
      %v145 = vpop.permute.xlu0 %144
      %148 = vset.pattern.permute.xlu0 0
      %149 = vperm.xlu0 %148, %v141
      %v150 = vpop.permute.xlu0 %149
      %v152 = vmul.f32 %v138, %v145
      %v153 = vmul.f32 %v139, %v150
      %v154 = vld [vmem:[%s4] sm:$0xff]
      %v156 = vsel %vm132, %v152, 0
      %v159 = vsel %vm132, %v153, 0
      %161 = vmatprep.subr.mxu0 0.0
      %162 = vmatpush1.msra.mxu0 %v154
      %163 = vmatprep.subr.mxu0 0.0
      %164 = vmatpush1.msra.mxu0 0.0
      %165 = vmatprep.subr.mxu0 0.0
      %166 = vmatpush1.msra.mxu0 0.0
      %167 = vmatprep.subr.mxu0 0.0
      %168 = vmatpush1.msra.mxu0 0.0
      %169 = vmatprep.subr.mxu0 0.0
      %170 = vmatpush1.msra.mxu0 0.0
      %171 = vmatprep.subr.mxu0 0.0
      %172 = vmatpush1.msra.mxu0 0.0
      %173 = vmatprep.subr.mxu0 0.0
      %174 = vmatpush1.msra.mxu0 0.0
      %175 = vmatprep.subr.mxu0 0.0
      %176 = vmatpush1.msra.mxu0 0.0
      %177 = vmatprep.subr.mxu0 0.0
      %178 = vmatpush1.msra.mxu0 0.0
      %179 = vmatprep.subr.mxu0 0.0
      %180 = vmatpush1.msra.mxu0 0.0
      %181 = vmatprep.subr.mxu0 0.0
      %182 = vmatpush1.msra.mxu0 0.0
      %183 = vmatprep.subr.mxu0 0.0
      %184 = vmatpush1.msra.mxu0 0.0
      %185 = vmatprep.subr.mxu0 0.0
      %186 = vmatpush1.msra.mxu0 0.0
      %187 = vmatprep.subr.mxu0 0.0
      %188 = vmatpush1.msra.mxu0 0.0
      %189 = vmatprep.subr.mxu0 0.0
      %190 = vmatpush1.msra.mxu0 0.0
      %191 = vmatprep.subr.mxu0 0.0
      %192 = vmatpush1.msra.mxu0 0.0
      %193 = vmatprep.subr.mxu0 0.0
      %194 = vmatpush1.msra.mxu0 0.0
      %195 = vmatprep.subr.mxu0 0.0
      %196 = vmatpush1.msra.mxu0 0.0
      %197 = vmatprep.subr.mxu0 0.0
      %198 = vmatpush1.msra.mxu0 0.0
      %199 = vmatprep.subr.mxu0 0.0
      %200 = vmatpush1.msra.mxu0 0.0
      %201 = vmatprep.subr.mxu0 0.0
      %202 = vmatpush1.msra.mxu0 0.0
      %203 = vmatprep.subr.mxu0 0.0
      %204 = vmatpush1.msra.mxu0 0.0
      %205 = vmatprep.subr.mxu0 0.0
      %206 = vmatpush1.msra.mxu0 0.0
      %207 = vmatprep.subr.mxu0 0.0
      %208 = vmatpush1.msra.mxu0 0.0
      %209 = vmatprep.subr.mxu0 0.0
      %210 = vmatpush1.msra.mxu0 0.0
      %211 = vmatprep.subr.mxu0 0.0
      %212 = vmatpush1.msra.mxu0 0.0
      %213 = vmatprep.subr.mxu0 0.0
      %214 = vmatpush1.msra.mxu0 0.0
      %215 = vmatprep.subr.mxu0 0.0
      %216 = vmatpush1.msra.mxu0 0.0
      %217 = vmatprep.subr.mxu0 0.0
      %218 = vmatpush1.msra.mxu0 0.0
      %219 = vmatprep.subr.mxu0 0.0
      %220 = vmatpush1.msra.mxu0 0.0
      %221 = vmatprep.subr.mxu0 0.0
      %222 = vmatpush1.msra.mxu0 0.0
      %223 = vmatprep.subr.mxu0 0.0
      %224 = vmatpush1.msra.mxu0 0.0
      %225 = vmatprep.mubr.f32.mxu0 0.0
      %226 = vmatmul.mubr.f32.gmra.mrb[0].mxu0 %v156
      %v227 = vpop.f32.mrb[0].mxu0
      %v228 = vadd.f32 0.0, %v227
      %v229 = vpop.f32.mrb[0].mxu0
      %230 = vmatprep.mubr.f32.mxu0 0.0
      %231 = vmatmul.mubr.f32.gmra.mrb[0].mxu0 %v159
      %v232 = vpop.f32.mrb[0].mxu0
      %v233 = vadd.f32 0.0, %v232
      %v234 = vpop.f32.mrb[0].mxu0
      %235 = vdwg.mxu0
      %v236 = vmax.f32 %v228, 0.0
      %v237 = vmax.f32 %v233, 0.0
      %238 = vst [vmem:[#allocation3] sm:$0xff] %v236
      %239 = vst [vmem:[#allocation3 + $0x8] sm:$0xff] %v237
    $region29: #{tpu_custom_call.1} parent=1 // pred_fallthru
      _
    // Predicated region
    $region30: #{tpu_custom_call.1} parent=1 // pred_check
      _
    $region31: #{tpu_custom_call.1} parent=1 // pred_check_branch
      %241 = sbr.rel (0) target = $region33
    $region32: #{tpu_custom_call.1} parent=1 // pred_region
      %s243 = ssub.s32 256, 256
      %244 = vsyncadd [#allocation4], %s243
      %s245 = sshll.u32 [#allocation3], 4
      %s246 = int_to_ptr.vmem [resolvable:$true] %s245
      %251 = dma.vmem_to_hbm [thread:$0]  %s246, 256, %s5, [#allocation4], 128, 128, 8
    $region33: #{tpu_custom_call.1} parent=1 // pred_fallthru
      _
    // Predicated region
    $region34: #{tpu_custom_call.1} parent=1 // pred_check
      _
    $region35: #{tpu_custom_call.1} parent=1 // pred_check_branch
      %253 = sbr.rel (0) target = $region37
    $region36: #{tpu_custom_call.1} parent=1 // pred_region
      %254 = dma.done [#allocation4], 256
    $region37: #{tpu_custom_call.1} parent=1 // pred_fallthru
      _
    %255 = vsyncpa [#allocation4], 1

</llo_original>
